<compile_context>
chip_gen: v7x
topology: tpu7x:2x2x1
jax: 0.10.0
libtpu: 0.0.40
codegen_flags: <defaults>
</compile_context>

<pallas_src>
import functools
import math

import jax
import jax.numpy as jnp
import numpy as np
from jax.experimental import pallas as pl
from jax.experimental.pallas import tpu as pltpu


def _round_up(x, m):
    return ((x + m - 1) // m) * m


def _choose_spatial_tiling(n_classes, hw, itemsize, target_logits_bytes=2 << 20):
    """Pick (hws_total, hws_tile) in units of 128-lane sublane rows.

    hws_total * 128 is the (possibly padded) flattened spatial extent;
    hws_tile is a multiple of 8 (or equals hws_total) so blocks satisfy the
    (8, 128) layout constraint, sized so one logits block is ~2 MiB.
    """
    hws = -(-hw // 128)                       # ceil(HW / 128)
    full_bytes = n_classes * hws * 128 * itemsize
    if hws <= 16 or full_bytes <= target_logits_bytes:
        return hws, hws                       # single spatial step per image
    tile = max(8, (target_logits_bytes // (n_classes * 128 * itemsize)) // 8 * 8)
    hws_total = _round_up(hws, tile)          # pad so the tile divides exactly
    return hws_total, tile


def _ohem_ce_kernel(x_ref, lbl_ref, loss_ref, ssum_ref, scnt_ref, *,
                    thresh, lb_ignore):
    """One grid step = one image x one spatial tile.

    x_ref    : (1, C, hws_tile, 128)  logits (native dtype, cast per class slab)
    lbl_ref  : (1, hws_tile, 128)     int32 labels
    loss_ref : (1, hws_tile, 128)     f32 per-pixel CE (0 where ignored)
    ssum_ref : (1, 1, 8, 128)         f32  [0,0] = sum of hard losses
    scnt_ref : (1, 1, 8, 128)         i32  [0,0] = #hard, [0,1] = #valid
    """
    n_classes = x_ref.shape[1]
    lbl = lbl_ref[0]                                         # (hws, 128) int32

    # Pass 1: running max over the class axis (per-class slabs, no big temps).
    m = x_ref[0, 0].astype(jnp.float32)
    for c in range(1, n_classes):
        m = jnp.maximum(m, x_ref[0, c].astype(jnp.float32))

    # Pass 2: sum-exp and the logit at the label (scalar-class compare, no iota).
    s = jnp.zeros_like(m)
    picked = jnp.zeros_like(m)
    for c in range(n_classes):
        xc = x_ref[0, c].astype(jnp.float32)
        s = s + jnp.exp(xc - m)
        picked = picked + jnp.where(lbl == c, xc, 0.0)

    valid = lbl != lb_ignore
    loss = jnp.where(valid, m + jnp.log(s) - picked, 0.0)
    loss_ref[0] = loss

    # Per-tile OHEM partials (reduced across tiles outside the kernel).
    hard = valid & (loss > thresh)          # ignored pixels are never "hard"
    sum_hard = jnp.sum(jnp.where(hard, loss, 0.0))
    cnt_hard = jnp.sum(hard.astype(jnp.int32))
    cnt_valid = jnp.sum(valid.astype(jnp.int32))

    row = jax.lax.broadcasted_iota(jnp.int32, (8, 128), 0)
    col = jax.lax.broadcasted_iota(jnp.int32, (8, 128), 1)
    ssum_ref[0, 0] = jnp.where((row == 0) & (col == 0), sum_hard,
                               jnp.zeros((8, 128), jnp.float32))
    cnt = jnp.where((row == 0) & (col == 0), cnt_hard,
                    jnp.zeros((8, 128), jnp.int32))
    cnt = jnp.where((row == 0) & (col == 1), cnt_valid, cnt)
    scnt_ref[0, 0] = cnt


def ohem_ce_loss(logits, labels, *, thresh=0.7, lb_ignore=255,
                 ignore_simple_sample_factor=16):
    """logits: (N, C, H, W) float (f32 or bf16); labels: (N, H, W) int.

    Returns scalar f32.  NOTE: when there are zero valid pixels the result is
    NaN (0/0), matching torch.mean over an empty selection.
    """
    N, C, H, W = logits.shape
    HW = H * W
    itemsize = jnp.dtype(logits.dtype).itemsize

    hws_total, hws_tile = _choose_spatial_tiling(C, HW, itemsize)
    HW_pad = hws_total * 128
    steps_hw = hws_total // hws_tile

    x = logits.reshape(N, C, HW)
    lbl = labels.reshape(N, HW).astype(jnp.int32)
    if HW_pad != HW:
        # Padded pixels carry the ignore label -> loss 0, not valid, not hard.
        x = jnp.pad(x, ((0, 0), (0, 0), (0, HW_pad - HW)))
        lbl = jnp.pad(lbl, ((0, 0), (0, HW_pad - HW)), constant_values=lb_ignore)
    x = x.reshape(N, C, hws_total, 128)
    lbl = lbl.reshape(N, hws_total, 128)

    th = -math.log(thresh)
    kernel = functools.partial(_ohem_ce_kernel, thresh=float(th),
                               lb_ignore=int(lb_ignore))

    # Explicit VMEM budget: double-buffered blocks + f32 accumulator temps.
    blk = (C * hws_tile * 128 * itemsize          # logits block
           + 2 * hws_tile * 128 * 4               # labels + loss blocks
           + 2 * 8 * 128 * 4)                     # stats tiles
    temps = 8 * hws_tile * 128 * 4                # m, s, picked, loss, slack
    vmem_limit = int(min(max(2 * (2 * blk + temps), 16 << 20), 48 << 20))

    loss, ssum, scnt = pl.pallas_call(
        kernel,
        out_shape=(
            jax.ShapeDtypeStruct((N, hws_total, 128), jnp.float32),   # per-pixel CE
            jax.ShapeDtypeStruct((N, steps_hw, 8, 128), jnp.float32),  # hard-loss sum
            jax.ShapeDtypeStruct((N, steps_hw, 8, 128), jnp.int32),    # exact counts
        ),
        grid_spec=pltpu.PrefetchScalarGridSpec(
            num_scalar_prefetch=0,
            grid=(N, steps_hw),
            in_specs=[
                pl.BlockSpec((1, C, hws_tile, 128), lambda b, h: (b, 0, h, 0)),
                pl.BlockSpec((1, hws_tile, 128), lambda b, h: (b, h, 0)),
            ],
            out_specs=[
                pl.BlockSpec((1, hws_tile, 128), lambda b, h: (b, h, 0)),
                pl.BlockSpec((1, 1, 8, 128), lambda b, h: (b, h, 0, 0)),
                pl.BlockSpec((1, 1, 8, 128), lambda b, h: (b, h, 0, 0)),
            ],
        ),
        compiler_params=pltpu.CompilerParams(
            dimension_semantics=("parallel", "parallel"),
            vmem_limit_bytes=vmem_limit),
    )(x, lbl)

    sum_hard = jnp.sum(ssum[:, :, 0, 0])
    n_hard = jnp.sum(scnt[:, :, 0, 0])
    n_valid = jnp.sum(scnt[:, :, 0, 1])
    n_min = n_valid // ignore_simple_sample_factor

    # Padded / ignored positions hold exactly 0 and real CE losses are >= 0,
    # so extra zeros can never change the top-k mean.
    flat = loss.reshape(-1)
    k_static = max(1, (N * HW) // ignore_simple_sample_factor)  # >= any n_min

    def _topk_mean(_):
        # TODO(synk): replace static-k top_k with an in-kernel loss histogram +
        # quantile threshold for very large inputs.
        topv = jax.lax.top_k(flat, k_static)[0]
        sel = jnp.arange(k_static) < n_min
        return (jnp.sum(jnp.where(sel, topv, 0.0))
                / jnp.maximum(n_min, 1).astype(jnp.float32))

    def _hard_mean(_):
        # n_hard == n_min == 0  ->  0/0 = NaN (matches torch.mean of empty).
        return sum_hard / n_hard.astype(jnp.float32)

    return jax.lax.cond(n_hard < n_min, _topk_mean, _hard_mean, None)


def _reference_ohem_ce_loss(logits, labels, thresh=0.7, lb_ignore=255,
                            factor=16):
    """Independent NumPy reference mirroring the PyTorch module."""
    lg = np.asarray(logits, dtype=np.float64)
    lb = np.asarray(labels)
    m = lg.max(axis=1, keepdims=True)
    lse = m[:, 0] + np.log(np.exp(lg - m).sum(axis=1))
    valid = lb != lb_ignore
    safe_lb = np.where(valid, lb, 0)
    picked = np.take_along_axis(lg, safe_lb[:, None], axis=1)[:, 0]
    loss = np.where(valid, lse - picked, 0.0).reshape(-1)
    th = -math.log(thresh)
    n_min = int(valid.sum()) // factor
    hard = loss[loss > th]
    if hard.size < n_min:
        hard = np.sort(loss)[::-1][:n_min]
    return float(hard.mean()) if hard.size else float("nan")


if __name__ == "__main__":
    key = jax.random.PRNGKey(0)
    k1, k2, k3 = jax.random.split(key, 3)
    N, C, H, W = 2, 4, 16, 16
    logits = jax.random.normal(k1, (N, C, H, W), dtype=jnp.float32)
    labels = jax.random.randint(k2, (N, H, W), 0, C, dtype=jnp.int32)
    # mark ~20% of pixels as ignore (255), like background in segmentation
    labels = jnp.where(jax.random.uniform(k3, (N, H, W)) < 0.2, 255, labels)

    loss = jax.jit(ohem_ce_loss)(logits, labels)
    jax.block_until_ready(loss)

    ref = _reference_ohem_ce_loss(logits, labels)
    assert abs(float(loss) - ref) < 1e-4, (float(loss), ref)
    print("KERNEL_OK")
</pallas_src>

<mosaic_0001>
module attributes {stable_mosaic.version = 11 : i64} {
  func.func @_ohem_ce_kernel(%arg0: i32, %arg1: i32, %arg2: memref<1x4x2x128xf32, #tpu.memory_space<vmem>>, %arg3: memref<1x2x128xi32, #tpu.memory_space<vmem>>, %arg4: memref<1x2x128xf32, #tpu.memory_space<vmem>>, %arg5: memref<1x1x8x128xf32, #tpu.memory_space<vmem>>, %arg6: memref<1x1x8x128xi32, #tpu.memory_space<vmem>>) attributes {dimension_semantics = [#tpu.dimension_semantics<parallel>, #tpu.dimension_semantics<parallel>], iteration_bounds = array<i64: 2, 1>, scalar_prefetch = 0 : i64, scratch_operands = 0 : i64, tpu.core_type = #tpu.core_type<tc>, window_params = [{transform_indices = @transform_0, window_bounds = array<i64: 1, 4, 2, 128>}, {transform_indices = @transform_1, window_bounds = array<i64: 1, 2, 128>}, {transform_indices = @transform_2, window_bounds = array<i64: 1, 2, 128>}, {transform_indices = @transform_3, window_bounds = array<i64: 1, 1, 8, 128>}, {transform_indices = @transform_4, window_bounds = array<i64: 1, 1, 8, 128>}]} {
    %c0 = arith.constant 0 : index
    %c0_0 = arith.constant 0 : index
    %c0_1 = arith.constant 0 : index
    %0 = vector.load %arg3[%c0, %c0_0, %c0_1] : memref<1x2x128xi32, #tpu.memory_space<vmem>>, vector<1x2x128xi32>
    %1 = vector.shape_cast %0 : vector<1x2x128xi32> to vector<2x128xi32>
    %c0_2 = arith.constant 0 : index
    %c0_3 = arith.constant 0 : index
    %c0_4 = arith.constant 0 : index
    %c0_5 = arith.constant 0 : index
    %2 = vector.load %arg2[%c0_2, %c0_3, %c0_4, %c0_5] : memref<1x4x2x128xf32, #tpu.memory_space<vmem>>, vector<1x1x2x128xf32>
    %3 = vector.shape_cast %2 : vector<1x1x2x128xf32> to vector<2x128xf32>
    %c0_6 = arith.constant 0 : index
    %c1 = arith.constant 1 : index
    %c0_7 = arith.constant 0 : index
    %c0_8 = arith.constant 0 : index
    %4 = vector.load %arg2[%c0_6, %c1, %c0_7, %c0_8] : memref<1x4x2x128xf32, #tpu.memory_space<vmem>>, vector<1x1x2x128xf32>
    %5 = vector.shape_cast %4 : vector<1x1x2x128xf32> to vector<2x128xf32>
    %6 = arith.maximumf %3, %5 : vector<2x128xf32>
    %c0_9 = arith.constant 0 : index
    %c2 = arith.constant 2 : index
    %c0_10 = arith.constant 0 : index
    %c0_11 = arith.constant 0 : index
    %7 = vector.load %arg2[%c0_9, %c2, %c0_10, %c0_11] : memref<1x4x2x128xf32, #tpu.memory_space<vmem>>, vector<1x1x2x128xf32>
    %8 = vector.shape_cast %7 : vector<1x1x2x128xf32> to vector<2x128xf32>
    %9 = arith.maximumf %6, %8 : vector<2x128xf32>
    %c0_12 = arith.constant 0 : index
    %c3 = arith.constant 3 : index
    %c0_13 = arith.constant 0 : index
    %c0_14 = arith.constant 0 : index
    %10 = vector.load %arg2[%c0_12, %c3, %c0_13, %c0_14] : memref<1x4x2x128xf32, #tpu.memory_space<vmem>>, vector<1x1x2x128xf32>
    %11 = vector.shape_cast %10 : vector<1x1x2x128xf32> to vector<2x128xf32>
    %12 = arith.maximumf %9, %11 : vector<2x128xf32>
    %cst = arith.constant 0.000000e+00 : f32
    %13 = vector.broadcast %cst : f32 to vector<2x128xf32>
    %cst_15 = arith.constant 0.000000e+00 : f32
    %14 = vector.broadcast %cst_15 : f32 to vector<2x128xf32>
    %c0_16 = arith.constant 0 : index
    %c0_17 = arith.constant 0 : index
    %c0_18 = arith.constant 0 : index
    %c0_19 = arith.constant 0 : index
    %15 = vector.load %arg2[%c0_16, %c0_17, %c0_18, %c0_19] : memref<1x4x2x128xf32, #tpu.memory_space<vmem>>, vector<1x1x2x128xf32>
    %16 = vector.shape_cast %15 : vector<1x1x2x128xf32> to vector<2x128xf32>
    %17 = arith.subf %16, %12 : vector<2x128xf32>
    %18 = math.exp %17 : vector<2x128xf32>
    %19 = arith.addf %13, %18 : vector<2x128xf32>
    %c0_i32 = arith.constant 0 : i32
    %20 = vector.broadcast %c0_i32 : i32 to vector<2x128xi32>
    %21 = arith.cmpi eq, %1, %20 : vector<2x128xi32>
    %cst_20 = arith.constant 0.000000e+00 : f32
    %22 = vector.broadcast %cst_20 : f32 to vector<2x128xf32>
    %23 = arith.select %21, %16, %22 : vector<2x128xi1>, vector<2x128xf32>
    %24 = arith.addf %14, %23 : vector<2x128xf32>
    %c0_21 = arith.constant 0 : index
    %c1_22 = arith.constant 1 : index
    %c0_23 = arith.constant 0 : index
    %c0_24 = arith.constant 0 : index
    %25 = vector.load %arg2[%c0_21, %c1_22, %c0_23, %c0_24] : memref<1x4x2x128xf32, #tpu.memory_space<vmem>>, vector<1x1x2x128xf32>
    %26 = vector.shape_cast %25 : vector<1x1x2x128xf32> to vector<2x128xf32>
    %27 = arith.subf %26, %12 : vector<2x128xf32>
    %28 = math.exp %27 : vector<2x128xf32>
    %29 = arith.addf %19, %28 : vector<2x128xf32>
    %c1_i32 = arith.constant 1 : i32
    %30 = vector.broadcast %c1_i32 : i32 to vector<2x128xi32>
    %31 = arith.cmpi eq, %1, %30 : vector<2x128xi32>
    %cst_25 = arith.constant 0.000000e+00 : f32
    %32 = vector.broadcast %cst_25 : f32 to vector<2x128xf32>
    %33 = arith.select %31, %26, %32 : vector<2x128xi1>, vector<2x128xf32>
    %34 = arith.addf %24, %33 : vector<2x128xf32>
    %c0_26 = arith.constant 0 : index
    %c2_27 = arith.constant 2 : index
    %c0_28 = arith.constant 0 : index
    %c0_29 = arith.constant 0 : index
    %35 = vector.load %arg2[%c0_26, %c2_27, %c0_28, %c0_29] : memref<1x4x2x128xf32, #tpu.memory_space<vmem>>, vector<1x1x2x128xf32>
    %36 = vector.shape_cast %35 : vector<1x1x2x128xf32> to vector<2x128xf32>
    %37 = arith.subf %36, %12 : vector<2x128xf32>
    %38 = math.exp %37 : vector<2x128xf32>
    %39 = arith.addf %29, %38 : vector<2x128xf32>
    %c2_i32 = arith.constant 2 : i32
    %40 = vector.broadcast %c2_i32 : i32 to vector<2x128xi32>
    %41 = arith.cmpi eq, %1, %40 : vector<2x128xi32>
    %cst_30 = arith.constant 0.000000e+00 : f32
    %42 = vector.broadcast %cst_30 : f32 to vector<2x128xf32>
    %43 = arith.select %41, %36, %42 : vector<2x128xi1>, vector<2x128xf32>
    %44 = arith.addf %34, %43 : vector<2x128xf32>
    %c0_31 = arith.constant 0 : index
    %c3_32 = arith.constant 3 : index
    %c0_33 = arith.constant 0 : index
    %c0_34 = arith.constant 0 : index
    %45 = vector.load %arg2[%c0_31, %c3_32, %c0_33, %c0_34] : memref<1x4x2x128xf32, #tpu.memory_space<vmem>>, vector<1x1x2x128xf32>
    %46 = vector.shape_cast %45 : vector<1x1x2x128xf32> to vector<2x128xf32>
    %47 = arith.subf %46, %12 : vector<2x128xf32>
    %48 = math.exp %47 : vector<2x128xf32>
    %49 = arith.addf %39, %48 : vector<2x128xf32>
    %c3_i32 = arith.constant 3 : i32
    %50 = vector.broadcast %c3_i32 : i32 to vector<2x128xi32>
    %51 = arith.cmpi eq, %1, %50 : vector<2x128xi32>
    %cst_35 = arith.constant 0.000000e+00 : f32
    %52 = vector.broadcast %cst_35 : f32 to vector<2x128xf32>
    %53 = arith.select %51, %46, %52 : vector<2x128xi1>, vector<2x128xf32>
    %54 = arith.addf %44, %53 : vector<2x128xf32>
    %c255_i32 = arith.constant 255 : i32
    %55 = vector.broadcast %c255_i32 : i32 to vector<2x128xi32>
    %56 = arith.cmpi ne, %1, %55 : vector<2x128xi32>
    %57 = math.log %49 : vector<2x128xf32>
    %58 = arith.addf %12, %57 : vector<2x128xf32>
    %59 = arith.subf %58, %54 : vector<2x128xf32>
    %cst_36 = arith.constant 0.000000e+00 : f32
    %60 = vector.broadcast %cst_36 : f32 to vector<2x128xf32>
    %61 = arith.select %56, %59, %60 : vector<2x128xi1>, vector<2x128xf32>
    %c0_37 = arith.constant 0 : index
    %c0_38 = arith.constant 0 : index
    %c0_39 = arith.constant 0 : index
    %62 = vector.load %arg4[%c0_37, %c0_38, %c0_39] : memref<1x2x128xf32, #tpu.memory_space<vmem>>, vector<1x2x128xf32>
    %63 = vector.shape_cast %62 : vector<1x2x128xf32> to vector<2x128xf32>
    %64 = vector.shape_cast %61 : vector<2x128xf32> to vector<1x2x128xf32>
    tpu.vector_store %arg4[%c0_37, %c0_38, %c0_39], %64 {strides = array<i32>} : memref<1x2x128xf32, #tpu.memory_space<vmem>>, vector<1x2x128xf32>,
    %cst_40 = arith.constant 0.356674939 : f32
    %65 = vector.broadcast %cst_40 : f32 to vector<2x128xf32>
    %66 = arith.cmpf ogt, %61, %65 : vector<2x128xf32>
    %67 = arith.andi %56, %66 : vector<2x128xi1>
    %cst_41 = arith.constant 0.000000e+00 : f32
    %68 = vector.broadcast %cst_41 : f32 to vector<2x128xf32>
    %69 = arith.select %67, %61, %68 : vector<2x128xi1>, vector<2x128xf32>
    %70 = vector.shape_cast %69 : vector<2x128xf32> to vector<1x2x128xf32>
    %cst_42 = arith.constant dense<0.000000e+00> : vector<1xf32>
    %71 = vector.multi_reduction <add>, %70, %cst_42 [1, 2] : vector<1x2x128xf32> to vector<1xf32>
    %72 = vector.shape_cast %71 : vector<1xf32> to vector<1x1x1xf32>
    %73 = vector.extract %72[0, 0, 0] : f32 from vector<1x1x1xf32>
    %74 = arith.extui %67 : vector<2x128xi1> to vector<2x128xi32>
    %75 = vector.shape_cast %74 : vector<2x128xi32> to vector<1x2x128xi32>
    %cst_43 = arith.constant dense<0> : vector<1xi32>
    %76 = vector.multi_reduction <add>, %75, %cst_43 [1, 2] : vector<1x2x128xi32> to vector<1xi32>
    %77 = vector.shape_cast %76 : vector<1xi32> to vector<1x1x1xi32>
    %78 = vector.extract %77[0, 0, 0] : i32 from vector<1x1x1xi32>
    %79 = arith.extui %56 : vector<2x128xi1> to vector<2x128xi32>
    %80 = vector.shape_cast %79 : vector<2x128xi32> to vector<1x2x128xi32>
    %cst_44 = arith.constant dense<0> : vector<1xi32>
    %81 = vector.multi_reduction <add>, %80, %cst_44 [1, 2] : vector<1x2x128xi32> to vector<1xi32>
    %82 = vector.shape_cast %81 : vector<1xi32> to vector<1x1x1xi32>
    %83 = vector.extract %82[0, 0, 0] : i32 from vector<1x1x1xi32>
    %84 = tpu.iota {dimensions = array<i32: 0>} : vector<8x128xi32>
    %85 = tpu.iota {dimensions = array<i32: 1>} : vector<8x128xi32>
    %c0_i32_45 = arith.constant 0 : i32
    %86 = vector.broadcast %c0_i32_45 : i32 to vector<8x128xi32>
    %87 = arith.cmpi eq, %84, %86 : vector<8x128xi32>
    %c0_i32_46 = arith.constant 0 : i32
    %88 = vector.broadcast %c0_i32_46 : i32 to vector<8x128xi32>
    %89 = arith.cmpi eq, %85, %88 : vector<8x128xi32>
    %90 = arith.andi %87, %89 : vector<8x128xi1>
    %cst_47 = arith.constant 0.000000e+00 : f32
    %91 = vector.broadcast %cst_47 : f32 to vector<8x128xf32>
    %92 = vector.broadcast %73 : f32 to vector<8x128xf32>
    %93 = arith.select %90, %92, %91 : vector<8x128xi1>, vector<8x128xf32>
    %c0_48 = arith.constant 0 : index
    %c0_49 = arith.constant 0 : index
    %c0_50 = arith.constant 0 : index
    %c0_51 = arith.constant 0 : index
    %94 = vector.load %arg5[%c0_48, %c0_49, %c0_50, %c0_51] : memref<1x1x8x128xf32, #tpu.memory_space<vmem>>, vector<1x1x8x128xf32>
    %95 = vector.shape_cast %94 : vector<1x1x8x128xf32> to vector<8x128xf32>
    %96 = vector.shape_cast %93 : vector<8x128xf32> to vector<1x1x8x128xf32>
    tpu.vector_store %arg5[%c0_48, %c0_49, %c0_50, %c0_51], %96 {strides = array<i32>} : memref<1x1x8x128xf32, #tpu.memory_space<vmem>>, vector<1x1x8x128xf32>,
    %c0_i32_52 = arith.constant 0 : i32
    %97 = vector.broadcast %c0_i32_52 : i32 to vector<8x128xi32>
    %98 = arith.cmpi eq, %84, %97 : vector<8x128xi32>
    %c0_i32_53 = arith.constant 0 : i32
    %99 = vector.broadcast %c0_i32_53 : i32 to vector<8x128xi32>
    %100 = arith.cmpi eq, %85, %99 : vector<8x128xi32>
    %101 = arith.andi %98, %100 : vector<8x128xi1>
    %c0_i32_54 = arith.constant 0 : i32
    %102 = vector.broadcast %c0_i32_54 : i32 to vector<8x128xi32>
    %103 = vector.broadcast %78 : i32 to vector<8x128xi32>
    %104 = arith.select %101, %103, %102 : vector<8x128xi1>, vector<8x128xi32>
    %c0_i32_55 = arith.constant 0 : i32
    %105 = vector.broadcast %c0_i32_55 : i32 to vector<8x128xi32>
    %106 = arith.cmpi eq, %84, %105 : vector<8x128xi32>
    %c1_i32_56 = arith.constant 1 : i32
    %107 = vector.broadcast %c1_i32_56 : i32 to vector<8x128xi32>
    %108 = arith.cmpi eq, %85, %107 : vector<8x128xi32>
    %109 = arith.andi %106, %108 : vector<8x128xi1>
    %110 = vector.broadcast %83 : i32 to vector<8x128xi32>
    %111 = arith.select %109, %110, %104 : vector<8x128xi1>, vector<8x128xi32>
    %c0_57 = arith.constant 0 : index
    %c0_58 = arith.constant 0 : index
    %c0_59 = arith.constant 0 : index
    %c0_60 = arith.constant 0 : index
    %112 = vector.load %arg6[%c0_57, %c0_58, %c0_59, %c0_60] : memref<1x1x8x128xi32, #tpu.memory_space<vmem>>, vector<1x1x8x128xi32>
    %113 = vector.shape_cast %112 : vector<1x1x8x128xi32> to vector<8x128xi32>
    %114 = vector.shape_cast %111 : vector<8x128xi32> to vector<1x1x8x128xi32>
    tpu.vector_store %arg6[%c0_57, %c0_58, %c0_59, %c0_60], %114 {strides = array<i32>} : memref<1x1x8x128xi32, #tpu.memory_space<vmem>>, vector<1x1x8x128xi32>,
    return
  }
  func.func @transform_0(%arg0: i32, %arg1: i32) -> (i32, i32, i32, i32) {
    %c0_i32 = arith.constant 0 : i32
    %c0_i32_0 = arith.constant 0 : i32
    %c0_i32_1 = arith.constant 0 : i32
    return %arg0, %c0_i32, %arg1, %c0_i32_0 : i32, i32, i32, i32
  }
  func.func @transform_1(%arg0: i32, %arg1: i32) -> (i32, i32, i32) {
    %c0_i32 = arith.constant 0 : i32
    %c0_i32_0 = arith.constant 0 : i32
    return %arg0, %arg1, %c0_i32 : i32, i32, i32
  }
  func.func @transform_2(%arg0: i32, %arg1: i32) -> (i32, i32, i32) {
    %c0_i32 = arith.constant 0 : i32
    %c0_i32_0 = arith.constant 0 : i32
    return %arg0, %arg1, %c0_i32 : i32, i32, i32
  }
  func.func @transform_3(%arg0: i32, %arg1: i32) -> (i32, i32, i32, i32) {
    %c0_i32 = arith.constant 0 : i32
    %c0_i32_0 = arith.constant 0 : i32
    %c0_i32_1 = arith.constant 0 : i32
    return %arg0, %arg1, %c0_i32, %c0_i32_0 : i32, i32, i32, i32
  }
  func.func @transform_4(%arg0: i32, %arg1: i32) -> (i32, i32, i32, i32) {
    %c0_i32 = arith.constant 0 : i32
    %c0_i32_0 = arith.constant 0 : i32
    %c0_i32_1 = arith.constant 0 : i32
    return %arg0, %arg1, %c0_i32, %c0_i32_0 : i32, i32, i32, i32
  }
}

</mosaic_0001>

<llo_original>
// kernel: ohem_ce_loss.1
$region0: #{ohem_ce_loss.1}
  #allocation0 [shape = 'u32[]', space=smem, size = 0x4, offset = 0x4, fixed_abs, tag = 'smem constant byte address 0x4 - core index']
  #allocation1 [shape = 'u32[144,128]{1,0:T(1,128)}', space=vmem, size = 0x12000, scoped, tag = 'internal scratch']
  %s0 = inlined_call_operand.vmem [shape: f32[2,4,2,128], index: 0, kind: input, shape index: {}]
  %s1 = inlined_call_operand.vmem [shape: s32[2,2,128], index: 1, kind: input, shape index: {}]
  %s2 = inlined_call_operand.vmem [shape: f32[2,2,128], index: 2, kind: output, shape index: {0}]
  %s3 = inlined_call_operand.vmem [shape: f32[2,1,8,128], index: 3, kind: output, shape index: {1}]
  %s4 = inlined_call_operand.vmem [shape: s32[2,1,8,128], index: 4, kind: output, shape index: {2}]
  %5 = xla_tuple %s2, %s3, %s4
  %s6 = sld [smem:[#allocation0]]
  $region57: #{ohem_ce_loss.1} parent=0
    _
  %s8 = ssub.s32 1, %s6
  %s9 = scalar_select 0, %s8, %s6
  loop: start=0, step=1, limit=4
  $region2: #{ohem_ce_loss.1} parent=0 // loop_pre_header
    _
  $region3: #{ohem_ce_loss.1} parent=0 // loop_header
    %s11 = sphi 0, %s15
    %p12 = scmp.ge.s32.totalorder %s11, 4
    %s18 = sphi 0, %s30
    %s19 = sphi 0, %s26
    %s20 = sphi 0, %s18
    %s21 = sphi 0, %s19
    %s22 = sphi 0, %s20
    %s23 = sphi 0, %s21
    %s35 = sphi 0, %s37
    %s38 = sphi 0, %s35
    %s39 = sphi 0, %s38
    %s55 = sphi 0, %s39
    %s63 = sphi 0, %s65
    %s66 = sphi 0, %s63
    %s67 = sphi 0, %s66
    %s83 = sphi 0, %s67
    %s91 = sphi 0, %s93
    %s94 = sphi 0, %s91
    %s95 = sphi 0, %s94
    %s111 = sphi 0, %s95
    %s119 = sphi 0, %s121
    %s122 = sphi 0, %s119
    %s123 = sphi 0, %s122
    %s139 = sphi 0, %s123
    %s147 = sphi 0, %s149
    %s150 = sphi 0, %s147
    %s151 = sphi 0, %s150
    %s167 = sphi 0, %s151
  $region4: #{ohem_ce_loss.1} parent=0 // loop_header_branch
    %14 = sbr.rel (%p12) target = $region8
  $region5: #{ohem_ce_loss.1} parent=0 // loop_body
    %s16 = ssub.s32 %s11, 1
    %s17 = ssub.s32 %s11, 2
    %s24 = sadd.s32 1, %s19
    %p25 = scmp.ge.s32.totalorder %s24, 1
    %s26 = scalar_select %p25, 0, %s24
    %s27 = sadd.s32 1, %s18
    %s28 = scalar_select %p25, %s27, %s18
    %p29 = scmp.ge.s32.totalorder %s28, 2
    %s30 = scalar_select %p29, 0, %s28
    %s31 = ssub.s32 %s18, %s30
    %s32 = ssub.s32 %s19, %s26
    %s33 = sor.u32 %s31, %s32
    %p34 = scmp.eq.s32.totalorder %s33, 0
    %s36 = sadd.s32 %s35, 1
    %s37 = scalar_select %p34, %s35, %s36
    %p40 = pneg %p34
    %p41 = scmp.eq.s32.totalorder %s11, 1
    %p42 = por %p40, %p41
    %p43 = scmp.ne.s32.totalorder %s35, %s38
    %p44 = scmp.eq.s32.totalorder %s11, 0
    %p45 = por %p43, %p44
    %p46 = scmp.ne.s32.totalorder %s35, %s38
    %p47 = scmp.eq.s32.totalorder %s16, 1
    %p48 = por %p46, %p47
    %p49 = scmp.ne.s32.totalorder %s38, %s39
    %p50 = scmp.eq.s32.totalorder %s16, 0
    %p51 = por %p49, %p50
    %p52 = scmp.ne.s32.totalorder %s38, %s39
    %p53 = scmp.eq.s32.totalorder %s17, 1
    %p54 = por %p52, %p53
    %p56 = scmp.ne.s32.totalorder %s39, %s55
    %p57 = scmp.eq.s32.totalorder %s17, 0
    %p58 = por %p56, %p57
    %s59 = ssub.s32 %s18, %s30
    %s60 = ssub.s32 %s19, %s26
    %s61 = sor.u32 %s59, %s60
    %p62 = scmp.eq.s32.totalorder %s61, 0
    %s64 = sadd.s32 %s63, 1
    %s65 = scalar_select %p62, %s63, %s64
    %p68 = pneg %p62
    %p69 = scmp.eq.s32.totalorder %s11, 1
    %p70 = por %p68, %p69
    %p71 = scmp.ne.s32.totalorder %s63, %s66
    %p72 = scmp.eq.s32.totalorder %s11, 0
    %p73 = por %p71, %p72
    %p74 = scmp.ne.s32.totalorder %s63, %s66
    %p75 = scmp.eq.s32.totalorder %s16, 1
    %p76 = por %p74, %p75
    %p77 = scmp.ne.s32.totalorder %s66, %s67
    %p78 = scmp.eq.s32.totalorder %s16, 0
    %p79 = por %p77, %p78
    %p80 = scmp.ne.s32.totalorder %s66, %s67
    %p81 = scmp.eq.s32.totalorder %s17, 1
    %p82 = por %p80, %p81
    %p84 = scmp.ne.s32.totalorder %s67, %s83
    %p85 = scmp.eq.s32.totalorder %s17, 0
    %p86 = por %p84, %p85
    %s87 = ssub.s32 %s18, %s30
    %s88 = ssub.s32 %s19, %s26
    %s89 = sor.u32 %s87, %s88
    %p90 = scmp.eq.s32.totalorder %s89, 0
    %s92 = sadd.s32 %s91, 1
    %s93 = scalar_select %p90, %s91, %s92
    %p96 = pneg %p90
    %p97 = scmp.eq.s32.totalorder %s11, 1
    %p98 = por %p96, %p97
    %p99 = scmp.ne.s32.totalorder %s91, %s94
    %p100 = scmp.eq.s32.totalorder %s11, 0
    %p101 = por %p99, %p100
    %p102 = scmp.ne.s32.totalorder %s91, %s94
    %p103 = scmp.eq.s32.totalorder %s16, 1
    %p104 = por %p102, %p103
    %p105 = scmp.ne.s32.totalorder %s94, %s95
    %p106 = scmp.eq.s32.totalorder %s16, 0
    %p107 = por %p105, %p106
    %p108 = scmp.ne.s32.totalorder %s94, %s95
    %p109 = scmp.eq.s32.totalorder %s17, 1
    %p110 = por %p108, %p109
    %p112 = scmp.ne.s32.totalorder %s95, %s111
    %p113 = scmp.eq.s32.totalorder %s17, 0
    %p114 = por %p112, %p113
    %s115 = ssub.s32 %s18, %s30
    %s116 = ssub.s32 %s19, %s26
    %s117 = sor.u32 %s115, %s116
    %p118 = scmp.eq.s32.totalorder %s117, 0
    %s120 = sadd.s32 %s119, 1
    %s121 = scalar_select %p118, %s119, %s120
    %p124 = pneg %p118
    %p125 = scmp.eq.s32.totalorder %s11, 1
    %p126 = por %p124, %p125
    %p127 = scmp.ne.s32.totalorder %s119, %s122
    %p128 = scmp.eq.s32.totalorder %s11, 0
    %p129 = por %p127, %p128
    %p130 = scmp.ne.s32.totalorder %s119, %s122
    %p131 = scmp.eq.s32.totalorder %s16, 1
    %p132 = por %p130, %p131
    %p133 = scmp.ne.s32.totalorder %s122, %s123
    %p134 = scmp.eq.s32.totalorder %s16, 0
    %p135 = por %p133, %p134
    %p136 = scmp.ne.s32.totalorder %s122, %s123
    %p137 = scmp.eq.s32.totalorder %s17, 1
    %p138 = por %p136, %p137
    %p140 = scmp.ne.s32.totalorder %s123, %s139
    %p141 = scmp.eq.s32.totalorder %s17, 0
    %p142 = por %p140, %p141
    %s143 = ssub.s32 %s18, %s30
    %s144 = ssub.s32 %s19, %s26
    %s145 = sor.u32 %s143, %s144
    %p146 = scmp.eq.s32.totalorder %s145, 0
    %s148 = sadd.s32 %s147, 1
    %s149 = scalar_select %p146, %s147, %s148
    %p152 = pneg %p146
    %p153 = scmp.eq.s32.totalorder %s11, 1
    %p154 = por %p152, %p153
    %p155 = scmp.ne.s32.totalorder %s147, %s150
    %p156 = scmp.eq.s32.totalorder %s11, 0
    %p157 = por %p155, %p156
    %p158 = scmp.ne.s32.totalorder %s147, %s150
    %p159 = scmp.eq.s32.totalorder %s16, 1
    %p160 = por %p158, %p159
    %p161 = scmp.ne.s32.totalorder %s150, %s151
    %p162 = scmp.eq.s32.totalorder %s16, 0
    %p163 = por %p161, %p162
    %p164 = scmp.ne.s32.totalorder %s150, %s151
    %p165 = scmp.eq.s32.totalorder %s17, 1
    %p166 = por %p164, %p165
    %p168 = scmp.ne.s32.totalorder %s151, %s167
    %p169 = scmp.eq.s32.totalorder %s17, 0
    %p170 = por %p168, %p169
    %p171 = scmp.le.s32.totalorder 1, %s11
    %p172 = scmp.lt.s32.totalorder %s11, 3
    %p173 = pnand %p171, %p172
    %p174 = pneg %p173
    // Predicated region
    $region9: #{ohem_ce_loss.1} parent=5 // pred_check
      _
    $region10: #{ohem_ce_loss.1} parent=5 // pred_check_branch
      %176 = sbr.rel (%p173) target = $region12
    $region11: #{ohem_ce_loss.1} parent=5 // pred_region
      %s177 = ssub.s32 %s11, 1
    $region12: #{ohem_ce_loss.1} parent=5 // pred_fallthru
      _
    %p178 = scmp.lt.s32.totalorder %s11, 2
    // Predicated region
    $region13: #{ohem_ce_loss.1} parent=5 // pred_check
      %p179 = pneg %p178
    $region14: #{ohem_ce_loss.1} parent=5 // pred_check_branch
      %181 = sbr.rel (%p179) target = $region16
    $region15: #{ohem_ce_loss.1} parent=5 // pred_region
      // Predicated region
      $region17: #{ohem_ce_loss.1} parent=15 // pred_check
        %p182 = pneg %p45
      $region18: #{ohem_ce_loss.1} parent=15 // pred_check_branch
        %184 = sbr.rel (%p182) target = $region20
      $region19: #{ohem_ce_loss.1} parent=15 // pred_region
        %p185 = scmp.lt.s32.totalorder %s18, 1
        %s186 = scalar_select %p185, %s18, 1
        %p187 = scmp.lt.s32.totalorder %s19, 0
        %s188 = scalar_select %p187, %s19, 0
        %s189 = smul.addr %s186, 4
        %s190 = sadd.s32 %s188, %s189
        %s191 = smul.addr %s190, 2
        %s192 = scalar_lea.vmem %s0, %s191
      $region20: #{ohem_ce_loss.1} parent=15 // pred_fallthru
        _
      // Predicated region
      $region21: #{ohem_ce_loss.1} parent=15 // pred_check
        %p193 = pneg %p73
      $region22: #{ohem_ce_loss.1} parent=15 // pred_check_branch
        %195 = sbr.rel (%p193) target = $region24
      $region23: #{ohem_ce_loss.1} parent=15 // pred_region
        %p196 = scmp.lt.s32.totalorder %s18, 1
        %s197 = scalar_select %p196, %s18, 1
        %p198 = scmp.lt.s32.totalorder %s19, 0
        %s199 = scalar_select %p198, %s19, 0
        %s200 = sadd.s32 %s199, %s197
        %s201 = smul.addr %s200, 2
        %s202 = scalar_lea.vmem %s1, %s201
      $region24: #{ohem_ce_loss.1} parent=15 // pred_fallthru
        _
    $region16: #{ohem_ce_loss.1} parent=5 // pred_fallthru
      _
    %p203 = scmp.le.s32.totalorder 1, %s11
    %p204 = scmp.lt.s32.totalorder %s11, 3
    %p205 = pnand %p203, %p204
    %p206 = pneg %p205
    // Predicated region
    $region25: #{ohem_ce_loss.1} parent=5 // pred_check
      _
    $region26: #{ohem_ce_loss.1} parent=5 // pred_check_branch
      %208 = sbr.rel (%p205) target = $region28
    $region27: #{ohem_ce_loss.1} parent=5 // pred_region
      %s209 = ssub.s32 %s11, 1
      %p210 = scmp.lt.s32.totalorder %s20, 1
      %s211 = scalar_select %p210, %s20, 1
      %p212 = scmp.lt.s32.totalorder %s21, 0
      %s213 = scalar_select %p212, %s21, 0
      %s214 = smul.addr %s211, 4
      %s215 = sadd.s32 %s213, %s214
      %s216 = smul.addr %s215, 2
      %s217 = scalar_lea.vmem %s0, %s216
      %p218 = pneg %p51
      %p219 = pneg %p48
      %p220 = scmp.lt.s32.totalorder %s20, 1
      %s221 = scalar_select %p220, %s20, 1
      %p222 = scmp.lt.s32.totalorder %s21, 0
      %s223 = scalar_select %p222, %s21, 0
      %s224 = sadd.s32 %s223, %s221
      %s225 = smul.addr %s224, 2
      %s226 = scalar_lea.vmem %s1, %s225
      %p227 = pneg %p79
      %p228 = pneg %p76
      %p229 = pneg %p107
      %p230 = pneg %p104
      %p231 = scmp.lt.s32.totalorder %s20, 1
      %s232 = scalar_select %p231, %s20, 1
      %p233 = scmp.lt.s32.totalorder %s21, 0
      %s234 = scalar_select %p233, %s21, 0
      %s235 = sadd.s32 %s234, %s232
      %s236 = smul.addr %s235, 2
      %s237 = scalar_lea.vmem %s2, %s236
      %p238 = pneg %p135
      %p239 = pneg %p132
      %p240 = scmp.lt.s32.totalorder %s20, 1
      %s241 = scalar_select %p240, %s20, 1
      %p242 = scmp.lt.s32.totalorder %s21, 0
      %s243 = scalar_select %p242, %s21, 0
      %s244 = sadd.s32 %s243, %s241
      %s245 = smul.addr %s244, 8
      %s246 = scalar_lea.vmem %s3, %s245
      %p247 = pneg %p163
      %p248 = pneg %p160
      %p249 = scmp.lt.s32.totalorder %s20, 1
      %s250 = scalar_select %p249, %s20, 1
      %p251 = scmp.lt.s32.totalorder %s21, 0
      %s252 = scalar_select %p251, %s21, 0
      %s253 = sadd.s32 %s252, %s250
      %s254 = smul.addr %s253, 8
      %s255 = scalar_lea.vmem %s4, %s254
      %p256 = scmp.lt.s32.totalorder %s20, 1
      %s257 = scalar_select %p256, %s20, 1
      %p258 = scmp.lt.s32.totalorder %s21, 0
      %s259 = scalar_select %p258, %s21, 0
      %s260 = smul.addr %s257, 4
      %s261 = sadd.s32 %s259, %s260
      %s262 = smul.addr %s261, 2
      %s263 = scalar_lea.vmem %s0, %s262
      %p264 = scmp.lt.s32.totalorder %s20, 1
      %s265 = scalar_select %p264, %s20, 1
      %p266 = scmp.lt.s32.totalorder %s21, 0
      %s267 = scalar_select %p266, %s21, 0
      %s268 = sadd.s32 %s267, %s265
      %s269 = smul.addr %s268, 2
      %s270 = scalar_lea.vmem %s1, %s269
      %p271 = scmp.lt.s32.totalorder %s20, 1
      %s272 = scalar_select %p271, %s20, 1
      %p273 = scmp.lt.s32.totalorder %s21, 0
      %s274 = scalar_select %p273, %s21, 0
      %s275 = sadd.s32 %s274, %s272
      %s276 = smul.addr %s275, 2
      %s277 = scalar_lea.vmem %s2, %s276
      %p278 = scmp.lt.s32.totalorder %s20, 1
      %s279 = scalar_select %p278, %s20, 1
      %p280 = scmp.lt.s32.totalorder %s21, 0
      %s281 = scalar_select %p280, %s21, 0
      %s282 = sadd.s32 %s281, %s279
      %s283 = smul.addr %s282, 8
      %s284 = scalar_lea.vmem %s3, %s283
      %p285 = scmp.lt.s32.totalorder %s20, 1
      %s286 = scalar_select %p285, %s20, 1
      %p287 = scmp.lt.s32.totalorder %s21, 0
      %s288 = scalar_select %p287, %s21, 0
      %s289 = sadd.s32 %s288, %s286
      %s290 = smul.addr %s289, 8
      %s291 = scalar_lea.vmem %s4, %s290
      %v292 = vld [vmem:[%s270] sm:$0x3]
      %v293 = vld [vmem:[%s263] sm:$0x3]
      %s294 = scalar_lea.vmem %s263, 2
      %v295 = vld [vmem:[%s294] sm:$0x3]
      %v296 = vmax.f32 %v293, %v295
      %s297 = scalar_lea.vmem %s263, 4
      %v298 = vld [vmem:[%s297] sm:$0x3]
      %v299 = vmax.f32 %v296, %v298
      %s300 = scalar_lea.vmem %s263, 6
      %v301 = vld [vmem:[%s300] sm:$0x3]
      %v302 = vmax.f32 %v299, %v301
      %v303 = vsub.f32 %v293, %v302
      %v304 = vmul.f32 %v303, 1.442695
      %v305 = vpow.pop %v304
      %v306 = vadd.f32 %v305, 0.0
      %vm307 = vcmp.eq.s32.totalorder %v292, 0
      %v308 = vsel %vm307, %v293, 0.0
      %v309 = vadd.f32 %v308, 0.0
      %v310 = vsub.f32 %v295, %v302
      %v311 = vmul.f32 %v310, 1.442695
      %v312 = vpow.pop %v311
      %v313 = vadd.f32 %v306, %v312
      %vm314 = vcmp.eq.s32.totalorder %v292, 1
      %v315 = vsel %vm314, %v295, 0.0
      %v316 = vadd.f32 %v309, %v315
      %v317 = vsub.f32 %v298, %v302
      %v318 = vmul.f32 %v317, 1.442695
      %v319 = vpow.pop %v318
      %v320 = vadd.f32 %v313, %v319
      %vm321 = vcmp.eq.s32.totalorder %v292, 2
      %v322 = vsel %vm321, %v298, 0.0
      %v323 = vadd.f32 %v316, %v322
      %v324 = vsub.f32 %v301, %v302
      %v325 = vmul.f32 %v324, 1.442695
      %v326 = vpow.pop %v325
      %v327 = vadd.f32 %v320, %v326
      %vm328 = vcmp.eq.s32.totalorder %v292, 3
      %v329 = vsel %vm328, %v301, 0.0
      %v330 = vadd.f32 %v323, %v329
      %vm331 = vcmp.ne.s32.totalorder %v292, 255
      %v332 = vlog2.pop %v327
      %v333 = vmul.f32 %v332, 0.6931472
      %v334 = vadd.f32 %v302, %v333
      %v335 = vsub.f32 %v334, %v330
      %v336 = vsel %vm331, %v335, 0.0
      %337 = vst [vmem:[%s277] sm:$0x3] %v336
      %vm338 = vcmp.gt.f32.partialorder %v336, 0.35667494
      %vm339 = vmand %vm331, %vm338
      %v340 = vsel %vm339, %v336, 0.0
      %vm341 = vcmask 1041408
      %v342 = vsel %vm341, %v340, 0.0
      %343 = vadd.xlane.f32.xlu0 %v342
      %v344 = vpop.xlane.xlu0 %343
      %v345 = vrot.slane %v344, 4
      %v346 = vadd.f32 %v344, %v345
      %v347 = vrot.slane %v346, 2
      %v348 = vadd.f32 %v346, %v347
      %v349 = vrot.slane %v348, 1
      %v350 = vadd.f32 %v348, %v349
      %s351 = vtos %v350
      %v352 = vsel %vm339, 1, 0
      %v353 = vsel %vm341, %v352, 0
      %v354 = vand.u32 %v353, 65535
      %v355 = vshrl.u32 %v353, 16
      %v356 = vcvt.s32.f32 %v354
      %v357 = vcvt.s32.f32 %v355
      %358 = vadd.xlane.f32.xlu0 %v356
      %v359 = vpop.xlane.xlu0 %358
      %360 = vadd.xlane.f32.xlu0 %v357
      %v361 = vpop.xlane.xlu0 %360
      %v362 = vcvt.f32.s32 %v359
      %v363 = vcvt.f32.s32 %v361
      %v364 = vshll.u32 %v363, 16
      %v365 = vadd.s32 %v364, %v362
      %v366 = vrot.slane %v365, 4
      %v367 = vadd.s32 %v365, %v366
      %v368 = vrot.slane %v367, 2
      %v369 = vadd.s32 %v367, %v368
      %v370 = vrot.slane %v369, 1
      %v371 = vadd.s32 %v369, %v370
      %s372 = vtos %v371
      %v373 = vsel %vm331, 1, 0
      %v374 = vsel %vm341, %v373, 0
      %v375 = vand.u32 %v374, 65535
      %v376 = vshrl.u32 %v374, 16
      %v377 = vcvt.s32.f32 %v375
      %v378 = vcvt.s32.f32 %v376
      %379 = vadd.xlane.f32.xlu0 %v377
      %v380 = vpop.xlane.xlu0 %379
      %381 = vadd.xlane.f32.xlu0 %v378
      %v382 = vpop.xlane.xlu0 %381
      %v383 = vcvt.f32.s32 %v380
      %v384 = vcvt.f32.s32 %v382
      %v385 = vshll.u32 %v384, 16
      %v386 = vadd.s32 %v385, %v383
      %v387 = vrot.slane %v386, 4
      %v388 = vadd.s32 %v386, %v387
      %v389 = vrot.slane %v388, 2
      %v390 = vadd.s32 %v388, %v389
      %v391 = vrot.slane %v390, 1
      %v392 = vadd.s32 %v390, %v391
      %s393 = vtos %v392
      %v394 = vlaneseq
      %v395 = vshrl.u32 %v394, 7
      %v396 = vlaneseq
      %v397 = vand.u32 %v396, 127
      %vm398 = vcmp.eq.s32.totalorder %v395, 0
      %vm399 = vcmp.eq.s32.totalorder %v397, 0
      %vm400 = vmand %vm398, %vm399
      %v401 = vstv %s351
      %v402 = vsel %vm400, %v401, 0.0
      %403 = vst [vmem:[%s284] sm:$0xff] %v402
      %v404 = vstv %s372
      %v405 = vsel %vm400, %v404, 0
      %vm406 = vcmp.eq.s32.totalorder %v397, 1
      %vm407 = vmand %vm398, %vm406
      %v408 = vstv %s393
      %v409 = vsel %vm407, %v408, %v405
      %410 = vst [vmem:[%s291] sm:$0xff] %v409
      %p411 = scmp.lt.s32.totalorder %s20, 1
      %s412 = scalar_select %p411, %s20, 1
      %p413 = scmp.lt.s32.totalorder %s21, 0
      %s414 = scalar_select %p413, %s21, 0
      %s415 = sadd.s32 %s414, %s412
      %s416 = smul.addr %s415, 2
      %s417 = scalar_lea.vmem %s2, %s416
      %p418 = scmp.lt.s32.totalorder %s20, 1
      %s419 = scalar_select %p418, %s20, 1
      %p420 = scmp.lt.s32.totalorder %s21, 0
      %s421 = scalar_select %p420, %s21, 0
      %s422 = sadd.s32 %s421, %s419
      %s423 = smul.addr %s422, 8
      %s424 = scalar_lea.vmem %s3, %s423
      %p425 = scmp.lt.s32.totalorder %s20, 1
      %s426 = scalar_select %p425, %s20, 1
      %p427 = scmp.lt.s32.totalorder %s21, 0
      %s428 = scalar_select %p427, %s21, 0
      %s429 = sadd.s32 %s428, %s426
      %s430 = smul.addr %s429, 8
      %s431 = scalar_lea.vmem %s4, %s430
      // Predicated region
      $region29: #{ohem_ce_loss.1} parent=27 // pred_check
        %p432 = pneg %p104
      $region30: #{ohem_ce_loss.1} parent=27 // pred_check_branch
        %434 = sbr.rel (%p432) target = $region32
      $region31: #{ohem_ce_loss.1} parent=27 // pred_region
        _
      $region32: #{ohem_ce_loss.1} parent=27 // pred_fallthru
        _
      // Predicated region
      $region33: #{ohem_ce_loss.1} parent=27 // pred_check
        %p435 = pneg %p132
      $region34: #{ohem_ce_loss.1} parent=27 // pred_check_branch
        %437 = sbr.rel (%p435) target = $region36
      $region35: #{ohem_ce_loss.1} parent=27 // pred_region
        _
      $region36: #{ohem_ce_loss.1} parent=27 // pred_fallthru
        _
      // Predicated region
      $region37: #{ohem_ce_loss.1} parent=27 // pred_check
        %p438 = pneg %p160
      $region38: #{ohem_ce_loss.1} parent=27 // pred_check_branch
        %440 = sbr.rel (%p438) target = $region40
      $region39: #{ohem_ce_loss.1} parent=27 // pred_region
        _
      $region40: #{ohem_ce_loss.1} parent=27 // pred_fallthru
        _
    $region28: #{ohem_ce_loss.1} parent=5 // pred_fallthru
      _
    %p441 = scmp.le.s32.totalorder 2, %s11
    // Predicated region
    $region41: #{ohem_ce_loss.1} parent=5 // pred_check
      %p442 = pneg %p441
    $region42: #{ohem_ce_loss.1} parent=5 // pred_check_branch
      %444 = sbr.rel (%p442) target = $region44
    $region43: #{ohem_ce_loss.1} parent=5 // pred_region
      %s445 = ssub.s32 %s11, 2
      // Predicated region
      $region45: #{ohem_ce_loss.1} parent=43 // pred_check
        %p446 = pneg %p110
      $region46: #{ohem_ce_loss.1} parent=43 // pred_check_branch
        %448 = sbr.rel (%p446) target = $region48
      $region47: #{ohem_ce_loss.1} parent=43 // pred_region
        %p449 = scmp.lt.s32.totalorder %s22, 1
        %s450 = scalar_select %p449, %s22, 1
        %p451 = scmp.lt.s32.totalorder %s23, 0
        %s452 = scalar_select %p451, %s23, 0
        %s453 = sadd.s32 %s452, %s450
        %s454 = smul.addr %s453, 2
        %s455 = scalar_lea.vmem %s2, %s454
      $region48: #{ohem_ce_loss.1} parent=43 // pred_fallthru
        _
      // Predicated region
      $region49: #{ohem_ce_loss.1} parent=43 // pred_check
        %p456 = pneg %p138
      $region50: #{ohem_ce_loss.1} parent=43 // pred_check_branch
        %458 = sbr.rel (%p456) target = $region52
      $region51: #{ohem_ce_loss.1} parent=43 // pred_region
        %p459 = scmp.lt.s32.totalorder %s22, 1
        %s460 = scalar_select %p459, %s22, 1
        %p461 = scmp.lt.s32.totalorder %s23, 0
        %s462 = scalar_select %p461, %s23, 0
        %s463 = sadd.s32 %s462, %s460
        %s464 = smul.addr %s463, 8
        %s465 = scalar_lea.vmem %s3, %s464
      $region52: #{ohem_ce_loss.1} parent=43 // pred_fallthru
        _
      // Predicated region
      $region53: #{ohem_ce_loss.1} parent=43 // pred_check
        %p466 = pneg %p166
      $region54: #{ohem_ce_loss.1} parent=43 // pred_check_branch
        %468 = sbr.rel (%p466) target = $region56
      $region55: #{ohem_ce_loss.1} parent=43 // pred_region
        %p469 = scmp.lt.s32.totalorder %s22, 1
        %s470 = scalar_select %p469, %s22, 1
        %p471 = scmp.lt.s32.totalorder %s23, 0
        %s472 = scalar_select %p471, %s23, 0
        %s473 = sadd.s32 %s472, %s470
        %s474 = smul.addr %s473, 8
        %s475 = scalar_lea.vmem %s4, %s474
      $region56: #{ohem_ce_loss.1} parent=43 // pred_fallthru
        _
    $region44: #{ohem_ce_loss.1} parent=5 // pred_fallthru
      _
  $region6: #{ohem_ce_loss.1} parent=0 // loop_footer
    %s15 = sadd.s32 1, %s11
  $region7: #{ohem_ce_loss.1} parent=0 // loop_footer_branch
    %10 = sbr.rel target = $region3
  $region8: #{ohem_ce_loss.1} parent=0 // loop_exit
    _

</llo_original>
